<compile_context>
chip_gen: v7x
topology: tpu7x:2x2x1
jax: 0.10.0
libtpu: 0.0.40
codegen_flags: <defaults>
</compile_context>

<pallas_src>
import jax
import jax.numpy as jnp
from jax.experimental import pallas as pl
from jax.experimental.pallas import tpu as pltpu

EPS = 1e-5  # BatchNorm2d default eps


# ----------------------------- kernels ---------------------------------------


def upsample_stats_kernel(x_ref, g_ref, s_ref):
    """Accumulate per-channel sums and the Gram matrix of the input.

    x_ref: (1, Cin, TM) tile of x (channel-major, spatial on lanes)
    g_ref: (Cin, Cin)   Gram accumulator  G = sum_pixels x x^T   (resident)
    s_ref: (Cin, 1)     channel-sum accumulator                   (resident)
    """
    @pl.when((pl.program_id(0) == 0) & (pl.program_id(1) == 0))
    def _init():
        g_ref[...] = jnp.zeros_like(g_ref)
        s_ref[...] = jnp.zeros_like(s_ref)

    x = x_ref[0]  # (Cin, TM)
    # G += x @ x^T  (contract over the lane/spatial axis, no explicit transpose)
    g_ref[...] += jax.lax.dot_general(
        x, x,
        dimension_numbers=(((1,), (1,)), ((), ())),
        preferred_element_type=jnp.float32,
    )
    s_ref[...] += jnp.sum(x, axis=1, keepdims=True)


def upsample_main_kernel(x_ref, w_ref, scale_ref, shift_ref, o_ref):
    """Fused 4-tap transposed-conv matmul + BN affine + ReLU, single output write.

    x_ref:     (1, Cin, TM)
    w_ref:     (4*Cout, Cin)   rows ordered r = (2*di+dj)*Cout + co
    scale_ref: (4*Cout, 1)     gamma / sqrt(var + eps), tiled over the 4 taps
    shift_ref: (4*Cout, 1)     beta - mean * scale,     tiled over the 4 taps
    o_ref:     (1, 4*Cout, TM)
    """
    x = x_ref[0]                                                  # (Cin, TM)
    y = jnp.dot(w_ref[...], x, preferred_element_type=jnp.float32)  # (4*Cout, TM)
    o_ref[0] = jnp.maximum(y * scale_ref[...] + shift_ref[...], 0.0)


# ----------------------------- wrapper ---------------------------------------


def _round_up(a, b):
    return (a + b - 1) // b * b


def _pick_tile(hw, cin, cout, budget_bytes=8 * 1024 * 1024):
    """Spatial tile (lane axis), multiple of 128, sized for VMEM on all gens
    (incl. v7x's 64 MiB): 2 buffers x (x tile + y tile) in f32 under `budget`."""
    per_col = 2 * 4 * (cin + 4 * cout)            # bytes per lane column
    tm = max(128, (budget_bytes // per_col) // 128 * 128)
    tm = min(tm, 4096)
    tm = min(tm, _round_up(hw, 128))
    return tm


def upsampler_forward(x_nchw, w, gamma, beta):
    """x_nchw: (N, Cin, H, W); w: (Cin, Cout, 2, 2) (PyTorch ConvTranspose2d layout)."""
    N, Cin, H, W = x_nchw.shape
    Cout = w.shape[1]
    HW = H * W
    C4 = 4 * Cout

    TM = _pick_tile(HW, Cin, Cout)
    HWp = _round_up(HW, TM)
    grid = (N, HWp // TM)

    # NCHW -> (N, Cin, HW) is a free reshape (no transpose); zero-pad spatial axis.
    x3 = x_nchw.reshape(N, Cin, HW).astype(jnp.float32)
    if HWp != HW:
        x3 = jnp.pad(x3, ((0, 0), (0, 0), (0, HWp - HW)))

    # ---- pass 1: input-only BN statistics (zeros in the pad contribute nothing) ----
    g, s = pl.pallas_call(
        upsample_stats_kernel,
        out_shape=(jax.ShapeDtypeStruct((Cin, Cin), jnp.float32),
                   jax.ShapeDtypeStruct((Cin, 1), jnp.float32)),
        grid=grid,
        in_specs=[pl.BlockSpec((1, Cin, TM), lambda n, m: (n, 0, m))],
        out_specs=(pl.BlockSpec((Cin, Cin), lambda n, m: (0, 0)),
                   pl.BlockSpec((Cin, 1), lambda n, m: (0, 0))),
        compiler_params=pltpu.CompilerParams(
            dimension_semantics=("arbitrary", "arbitrary")),
    )(x3)

    # ---- finalize stats analytically (tiny, O(Cin^2 * Cout)) ----
    # w_rows[r, ci] = W[ci, co, di, dj] with r = (2*di+dj)*Cout + co
    w_rows = jnp.transpose(w.astype(jnp.float32), (2, 3, 1, 0)).reshape(C4, Cin)
    count = 4.0 * N * HW
    sum_y = w_rows @ s[:, 0]                                     # (4*Cout,)
    mean = jnp.sum(sum_y.reshape(4, Cout), axis=0) / count       # (Cout,)
    sq = jnp.einsum('rc,cd,rd->r', w_rows, g, w_rows)            # (4*Cout,)
    e_y2 = jnp.sum(sq.reshape(4, Cout), axis=0) / count
    var = jnp.maximum(e_y2 - mean * mean, 0.0)                   # biased var (PyTorch)
    inv = jax.lax.rsqrt(var + EPS)
    scale = gamma.astype(jnp.float32) * inv
    shift = beta.astype(jnp.float32) - mean * scale
    scale4 = jnp.tile(scale, 4).reshape(C4, 1)
    shift4 = jnp.tile(shift, 4).reshape(C4, 1)

    # ---- pass 2: fused matmul + affine + ReLU, pipelined & parallel over (N, M) ----
    y = pl.pallas_call(
        upsample_main_kernel,
        out_shape=jax.ShapeDtypeStruct((N, C4, HWp), jnp.float32),
        grid=grid,
        in_specs=[
            pl.BlockSpec((1, Cin, TM), lambda n, m: (n, 0, m)),
            pl.BlockSpec((C4, Cin), lambda n, m: (0, 0)),   # weights stay resident
            pl.BlockSpec((C4, 1), lambda n, m: (0, 0)),
            pl.BlockSpec((C4, 1), lambda n, m: (0, 0)),
        ],
        out_specs=pl.BlockSpec((1, C4, TM), lambda n, m: (n, 0, m)),
        compiler_params=pltpu.CompilerParams(
            dimension_semantics=("parallel", "parallel")),
    )(x3, w_rows, scale4, shift4)

    # scatter taps back to NCHW: out[n, co, 2i+di, 2j+dj] = y[n, (2di+dj)*Cout+co, i*W+j]
    y = y[:, :, :HW].reshape(N, 2, 2, Cout, H, W)
    y = jnp.transpose(y, (0, 3, 4, 1, 5, 2)).reshape(N, Cout, 2 * H, 2 * W)
    return y


upsampler_forward = jax.jit(upsampler_forward)


# ----------------------------- reference --------------------------------------


def upsampler_ref(x, w, gamma, beta):
    """Pure-JAX reference (NCHW), mirrors the PyTorch module forward in train mode."""
    y = jnp.einsum('nchw,cokl->nohkwl', x, w)
    N, Co, H, _, W, _ = y.shape
    y = y.reshape(N, Co, 2 * H, 2 * W)
    mean = jnp.mean(y, axis=(0, 2, 3), keepdims=True)
    var = jnp.mean((y - mean) ** 2, axis=(0, 2, 3), keepdims=True)
    yn = (y - mean) * jax.lax.rsqrt(var + EPS)
    yn = yn * gamma.reshape(1, -1, 1, 1) + beta.reshape(1, -1, 1, 1)
    return jnp.maximum(yn, 0.0)


if __name__ == "__main__":
    key = jax.random.PRNGKey(0)
    kx, kw, kg, kb = jax.random.split(key, 4)

    N, Cin, Cout, H, W = 2, 4, 8, 16, 16
    x = jax.random.normal(kx, (N, Cin, H, W), dtype=jnp.float32)
    # ConvTranspose2d weight shape: (in_channels, out_channels, kH, kW), bias=False
    w = 0.1 * jax.random.normal(kw, (Cin, Cout, 2, 2), dtype=jnp.float32)
    # BatchNorm2d affine params (non-trivial to exercise scale/shift path)
    gamma = 1.0 + 0.1 * jax.random.normal(kg, (Cout,), dtype=jnp.float32)
    beta = 0.1 * jax.random.normal(kb, (Cout,), dtype=jnp.float32)

    out = jax.block_until_ready(upsampler_forward(x, w, gamma, beta))
    ref = upsampler_ref(x, w, gamma, beta)

    assert out.shape == (N, Cout, 2 * H, 2 * W), out.shape
    err = float(jnp.max(jnp.abs(out - ref)))
    assert jnp.allclose(out, ref, atol=2e-4, rtol=2e-4), err
    # NOTE: running_mean / running_var buffer updates of BatchNorm2d (training-mode
    # side effect) are not materialized; only the forward activation is produced.
    print("KERNEL_OK")
</pallas_src>

<mosaic_0001>
module attributes {stable_mosaic.version = 11 : i64} {
  func.func @upsample_stats_kernel(%arg0: i32, %arg1: i32, %arg2: memref<1x4x256xf32, #tpu.memory_space<vmem>>, %arg3: memref<4x4xf32, #tpu.memory_space<vmem>>, %arg4: memref<4x1xf32, #tpu.memory_space<vmem>>) attributes {dimension_semantics = [#tpu.dimension_semantics<arbitrary>, #tpu.dimension_semantics<arbitrary>], iteration_bounds = array<i64: 2, 1>, scalar_prefetch = 0 : i64, scratch_operands = 0 : i64, tpu.core_type = #tpu.core_type<tc>, window_params = [{transform_indices = @transform_0, window_bounds = array<i64: 1, 4, 256>}, {pipeline_mode = #tpu.pipeline_mode<synchronous>, transform_indices = @transform_1, window_bounds = array<i64: 4, 4>}, {pipeline_mode = #tpu.pipeline_mode<synchronous>, transform_indices = @transform_2, window_bounds = array<i64: 4, 1>}]} {
    %c0_i32 = arith.constant 0 : i32
    %0 = arith.cmpi eq, %arg0, %c0_i32 : i32
    %c0_i32_0 = arith.constant 0 : i32
    %1 = arith.cmpi eq, %arg1, %c0_i32_0 : i32
    %2 = arith.andi %0, %1 : i1
    %3 = arith.extui %2 : i1 to i32
    %c0_i32_1 = arith.constant 0 : i32
    %4 = arith.cmpi ne, %3, %c0_i32_1 : i32
    scf.if %4 {
      %cst_13 = arith.constant 0.000000e+00 : f32
      %16 = vector.broadcast %cst_13 : f32 to vector<4x4xf32>
      %c0_14 = arith.constant 0 : index
      %c0_15 = arith.constant 0 : index
      %17 = vector.load %arg3[%c0_14, %c0_15] : memref<4x4xf32, #tpu.memory_space<vmem>>, vector<4x4xf32>
      tpu.vector_store %arg3[%c0_14, %c0_15], %16 {strides = array<i32>} : memref<4x4xf32, #tpu.memory_space<vmem>>, vector<4x4xf32>,
      %cst_16 = arith.constant 0.000000e+00 : f32
      %18 = vector.broadcast %cst_16 : f32 to vector<4x1xf32>
      %c0_17 = arith.constant 0 : index
      %c0_18 = arith.constant 0 : index
      %19 = vector.load %arg4[%c0_17, %c0_18] : memref<4x1xf32, #tpu.memory_space<vmem>>, vector<4x1xf32>
      tpu.vector_store %arg4[%c0_17, %c0_18], %18 {strides = array<i32>} : memref<4x1xf32, #tpu.memory_space<vmem>>, vector<4x1xf32>,
    } else {
    }
    %c0 = arith.constant 0 : index
    %c0_2 = arith.constant 0 : index
    %c0_3 = arith.constant 0 : index
    %5 = vector.load %arg2[%c0, %c0_2, %c0_3] : memref<1x4x256xf32, #tpu.memory_space<vmem>>, vector<1x4x256xf32>
    %6 = vector.shape_cast %5 : vector<1x4x256xf32> to vector<4x256xf32>
    %c0_4 = arith.constant 0 : index
    %c0_5 = arith.constant 0 : index
    %7 = vector.load %arg3[%c0_4, %c0_5] : memref<4x4xf32, #tpu.memory_space<vmem>>, vector<4x4xf32>
    %cst = arith.constant dense<0.000000e+00> : vector<4x4xf32>
    %8 = tpu.matmul %6, %6, %cst {dimension_numbers = #tpu.dot_dimension_numbers<[1], [1], [0], [0], [0, 0, 1, 0], [], []>} : vector<4x256xf32>, vector<4x256xf32>, vector<4x4xf32> -> vector<4x4xf32>
    %9 = arith.addf %7, %8 : vector<4x4xf32>
    %c0_6 = arith.constant 0 : index
    %c0_7 = arith.constant 0 : index
    %10 = vector.load %arg3[%c0_6, %c0_7] : memref<4x4xf32, #tpu.memory_space<vmem>>, vector<4x4xf32>
    tpu.vector_store %arg3[%c0_6, %c0_7], %9 {strides = array<i32>} : memref<4x4xf32, #tpu.memory_space<vmem>>, vector<4x4xf32>,
    %c0_8 = arith.constant 0 : index
    %c0_9 = arith.constant 0 : index
    %11 = vector.load %arg4[%c0_8, %c0_9] : memref<4x1xf32, #tpu.memory_space<vmem>>, vector<4x1xf32>
    %cst_10 = arith.constant dense<0.000000e+00> : vector<4xf32>
    %12 = vector.multi_reduction <add>, %6, %cst_10 [1] : vector<4x256xf32> to vector<4xf32>
    %13 = vector.shape_cast %12 : vector<4xf32> to vector<4x1xf32>
    %14 = arith.addf %11, %13 : vector<4x1xf32>
    %c0_11 = arith.constant 0 : index
    %c0_12 = arith.constant 0 : index
    %15 = vector.load %arg4[%c0_11, %c0_12] : memref<4x1xf32, #tpu.memory_space<vmem>>, vector<4x1xf32>
    tpu.vector_store %arg4[%c0_11, %c0_12], %14 {strides = array<i32>} : memref<4x1xf32, #tpu.memory_space<vmem>>, vector<4x1xf32>,
    return
  }
  func.func @transform_0(%arg0: i32, %arg1: i32) -> (i32, i32, i32) {
    %c0_i32 = arith.constant 0 : i32
    %c0_i32_0 = arith.constant 0 : i32
    return %arg0, %c0_i32, %arg1 : i32, i32, i32
  }
  func.func @transform_1(%arg0: i32, %arg1: i32) -> (i32, i32) {
    %c0_i32 = arith.constant 0 : i32
    %c0_i32_0 = arith.constant 0 : i32
    %c0_i32_1 = arith.constant 0 : i32
    return %c0_i32, %c0_i32_0 : i32, i32
  }
  func.func @transform_2(%arg0: i32, %arg1: i32) -> (i32, i32) {
    %c0_i32 = arith.constant 0 : i32
    %c0_i32_0 = arith.constant 0 : i32
    %c0_i32_1 = arith.constant 0 : i32
    return %c0_i32, %c0_i32_0 : i32, i32
  }
}

module attributes {stable_mosaic.version = 11 : i64} {
  func.func @upsample_main_kernel(%arg0: i32, %arg1: i32, %arg2: memref<1x4x256xf32, #tpu.memory_space<vmem>>, %arg3: memref<32x4xf32, #tpu.memory_space<vmem>>, %arg4: memref<32x1xf32, #tpu.memory_space<vmem>>, %arg5: memref<32x1xf32, #tpu.memory_space<vmem>>, %arg6: memref<1x32x256xf32, #tpu.memory_space<vmem>>) attributes {dimension_semantics = [#tpu.dimension_semantics<parallel>, #tpu.dimension_semantics<parallel>], iteration_bounds = array<i64: 2, 1>, scalar_prefetch = 0 : i64, scratch_operands = 0 : i64, tpu.core_type = #tpu.core_type<tc>, window_params = [{transform_indices = @transform_0, window_bounds = array<i64: 1, 4, 256>}, {pipeline_mode = #tpu.pipeline_mode<synchronous>, transform_indices = @transform_1, window_bounds = array<i64: 32, 4>}, {pipeline_mode = #tpu.pipeline_mode<synchronous>, transform_indices = @transform_2, window_bounds = array<i64: 32, 1>}, {pipeline_mode = #tpu.pipeline_mode<synchronous>, transform_indices = @transform_3, window_bounds = array<i64: 32, 1>}, {transform_indices = @transform_4, window_bounds = array<i64: 1, 32, 256>}]} {
    %c0 = arith.constant 0 : index
    %c0_0 = arith.constant 0 : index
    %c0_1 = arith.constant 0 : index
    %0 = vector.load %arg2[%c0, %c0_0, %c0_1] : memref<1x4x256xf32, #tpu.memory_space<vmem>>, vector<1x4x256xf32>
    %1 = vector.shape_cast %0 : vector<1x4x256xf32> to vector<4x256xf32>
    %c0_2 = arith.constant 0 : index
    %c0_3 = arith.constant 0 : index
    %2 = vector.load %arg3[%c0_2, %c0_3] : memref<32x4xf32, #tpu.memory_space<vmem>>, vector<32x4xf32>
    %cst = arith.constant dense<0.000000e+00> : vector<32x256xf32>
    %3 = tpu.matmul %2, %1, %cst {dimension_numbers = #tpu.dot_dimension_numbers<[1], [0], [0], [1], [0, 0, 1, 1], [], []>} : vector<32x4xf32>, vector<4x256xf32>, vector<32x256xf32> -> vector<32x256xf32>
    %c0_4 = arith.constant 0 : index
    %c0_5 = arith.constant 0 : index
    %4 = vector.load %arg4[%c0_4, %c0_5] : memref<32x1xf32, #tpu.memory_space<vmem>>, vector<32x1xf32>
    %5 = vector.broadcast %4 : vector<32x1xf32> to vector<32x256xf32>
    %6 = arith.mulf %3, %5 : vector<32x256xf32>
    %c0_6 = arith.constant 0 : index
    %c0_7 = arith.constant 0 : index
    %7 = vector.load %arg5[%c0_6, %c0_7] : memref<32x1xf32, #tpu.memory_space<vmem>>, vector<32x1xf32>
    %8 = vector.broadcast %7 : vector<32x1xf32> to vector<32x256xf32>
    %9 = arith.addf %6, %8 : vector<32x256xf32>
    %cst_8 = arith.constant 0.000000e+00 : f32
    %10 = vector.broadcast %cst_8 : f32 to vector<32x256xf32>
    %11 = arith.maximumf %9, %10 : vector<32x256xf32>
    %c0_9 = arith.constant 0 : index
    %c0_10 = arith.constant 0 : index
    %c0_11 = arith.constant 0 : index
    %12 = vector.load %arg6[%c0_9, %c0_10, %c0_11] : memref<1x32x256xf32, #tpu.memory_space<vmem>>, vector<1x32x256xf32>
    %13 = vector.shape_cast %12 : vector<1x32x256xf32> to vector<32x256xf32>
    %14 = vector.shape_cast %11 : vector<32x256xf32> to vector<1x32x256xf32>
    tpu.vector_store %arg6[%c0_9, %c0_10, %c0_11], %14 {strides = array<i32>} : memref<1x32x256xf32, #tpu.memory_space<vmem>>, vector<1x32x256xf32>,
    return
  }
  func.func @transform_0(%arg0: i32, %arg1: i32) -> (i32, i32, i32) {
    %c0_i32 = arith.constant 0 : i32
    %c0_i32_0 = arith.constant 0 : i32
    return %arg0, %c0_i32, %arg1 : i32, i32, i32
  }
  func.func @transform_1(%arg0: i32, %arg1: i32) -> (i32, i32) {
    %c0_i32 = arith.constant 0 : i32
    %c0_i32_0 = arith.constant 0 : i32
    %c0_i32_1 = arith.constant 0 : i32
    return %c0_i32, %c0_i32_0 : i32, i32
  }
  func.func @transform_2(%arg0: i32, %arg1: i32) -> (i32, i32) {
    %c0_i32 = arith.constant 0 : i32
    %c0_i32_0 = arith.constant 0 : i32
    %c0_i32_1 = arith.constant 0 : i32
    return %c0_i32, %c0_i32_0 : i32, i32
  }
  func.func @transform_3(%arg0: i32, %arg1: i32) -> (i32, i32) {
    %c0_i32 = arith.constant 0 : i32
    %c0_i32_0 = arith.constant 0 : i32
    %c0_i32_1 = arith.constant 0 : i32
    return %c0_i32, %c0_i32_0 : i32, i32
  }
  func.func @transform_4(%arg0: i32, %arg1: i32) -> (i32, i32, i32) {
    %c0_i32 = arith.constant 0 : i32
    %c0_i32_0 = arith.constant 0 : i32
    return %arg0, %c0_i32, %arg1 : i32, i32, i32
  }
}

</mosaic_0001>

<llo_original>
// kernel: tile.18
$region0: #{tile.18}
  #allocation0 [shape = 's32[1]{0}', space=sflag, size = 0x4, scoped, tag = 'scoped memory for tile.18']
  %s0 = inlined_call_operand.vmem [shape: f32[8], index: 0, kind: input, shape index: {}]
  %s1 = inlined_call_operand.vmem [shape: f32[4,8], index: 1, kind: output, shape index: {}]
  // Predicated region
  $region2: #{tile.18} parent=0 // pred_check
    _
  $region3: #{tile.18} parent=0 // pred_check_branch
    %3 = sbr.rel (0) target = $region5
  $region4: #{tile.18} parent=0 // pred_region
    _
  $region5: #{tile.18} parent=0 // pred_fallthru
    _
  %v4 = vld [vmem:[%s0] ss:$0 sm:$0xff]
  %5 = vst [vmem:[%s1] sm:$0xf] %v4

// kernel: tile.0
$region0: #{tile.0}
  %s0 = inlined_call_operand.vmem [shape: f32[4,8], index: 0, kind: input, shape index: {}]
  %s1 = inlined_call_operand.vmem [shape: f32[32,1], index: 1, kind: output, shape index: {}]
  $region1: #{tile.0} parent=0
    #allocation0 [shape = 'u8[4096]{0}', space=vmem, size = 0x1000, scoped, tag = 'scoped mem for input reshape']
    %s3 = sshllo.u32 0, 4
    %v4 = vld [vmem:[%s0] sm:%s3]
    %5 = vst [vmem:[#allocation0] sm:%s3] %v4
    %v6 = vld [vmem:[#allocation0] sm:$0xf]
    %vm7 = vcmask 7168
    %8 = vst.msk [vmem:[%s1] ss:$8 sm:$0xf] %vm7, %v6
    %v9 = vld [vmem:[#allocation0] sm:$0xf]
    %10 = vrot.lane.b32.xlu0 %v9, 127
    %v11 = vpop.permute.xlu0 %10
    %vm12 = vcmask 7168
    %s13 = scalar_lea.vmem %s1, 1
    %14 = vst.msk [vmem:[%s13] ss:$8 sm:$0xf] %vm12, %v11
    %v15 = vld [vmem:[#allocation0] sm:$0xf]
    %16 = vrot.lane.b32.xlu0 %v15, 126
    %v17 = vpop.permute.xlu0 %16
    %vm18 = vcmask 7168
    %s19 = scalar_lea.vmem %s1, 2
    %20 = vst.msk [vmem:[%s19] ss:$8 sm:$0xf] %vm18, %v17
    %v21 = vld [vmem:[#allocation0] sm:$0xf]
    %22 = vrot.lane.b32.xlu0 %v21, 125
    %v23 = vpop.permute.xlu0 %22
    %vm24 = vcmask 7168
    %s25 = scalar_lea.vmem %s1, 3
    %26 = vst.msk [vmem:[%s25] ss:$8 sm:$0xf] %vm24, %v23
    %v27 = vld [vmem:[#allocation0] sm:$0xf]
    %28 = vrot.lane.b32.xlu0 %v27, 124
    %v29 = vpop.permute.xlu0 %28
    %vm30 = vcmask 7168
    %s31 = scalar_lea.vmem %s1, 4
    %32 = vst.msk [vmem:[%s31] ss:$8 sm:$0xf] %vm30, %v29
    %v33 = vld [vmem:[#allocation0] sm:$0xf]
    %34 = vrot.lane.b32.xlu0 %v33, 123
    %v35 = vpop.permute.xlu0 %34
    %vm36 = vcmask 7168
    %s37 = scalar_lea.vmem %s1, 5
    %38 = vst.msk [vmem:[%s37] ss:$8 sm:$0xf] %vm36, %v35
    %v39 = vld [vmem:[#allocation0] sm:$0xf]
    %40 = vrot.lane.b32.xlu0 %v39, 122
    %v41 = vpop.permute.xlu0 %40
    %vm42 = vcmask 7168
    %s43 = scalar_lea.vmem %s1, 6
    %44 = vst.msk [vmem:[%s43] ss:$8 sm:$0xf] %vm42, %v41
    %v45 = vld [vmem:[#allocation0] sm:$0xf]
    %46 = vrot.lane.b32.xlu0 %v45, 121
    %v47 = vpop.permute.xlu0 %46
    %vm48 = vcmask 7168
    %s49 = scalar_lea.vmem %s1, 7
    %50 = vst.msk [vmem:[%s49] ss:$8 sm:$0xf] %vm48, %v47

// kernel: upsampler_forward.2
$region0: #{upsampler_forward.2}
  #allocation0 [shape = 'u32[]', space=smem, size = 0x4, offset = 0x4, fixed_abs, tag = 'smem constant byte address 0x4 - core index']
  #allocation1 [shape = 'u32[144,128]{1,0:T(1,128)}', space=vmem, size = 0x12000, scoped, tag = 'internal scratch']
  %s0 = inlined_call_operand.vmem [shape: f32[2,4,256], index: 0, kind: input, shape index: {}]
  %s1 = inlined_call_operand.vmem [shape: f32[4,4], index: 1, kind: output, shape index: {0}]
  %s2 = inlined_call_operand.vmem [shape: f32[4,1], index: 2, kind: output, shape index: {1}]
  %3 = xla_tuple %s1, %s2
  %s4 = sld [smem:[#allocation0]]
  $region49: #{upsampler_forward.2} parent=0
    _
  %s6 = ssub.s32 1, %s4
  %s7 = scalar_select 0, %s6, %s4
  loop: start=0, step=1, limit=4
  $region2: #{upsampler_forward.2} parent=0 // loop_pre_header
    _
  $region3: #{upsampler_forward.2} parent=0 // loop_header
    %s9 = sphi 0, %s13
    %p10 = scmp.ge.s32.totalorder %s9, 4
    %s16 = sphi 0, %s28
    %s17 = sphi 0, %s24
    %s18 = sphi 0, %s16
    %s19 = sphi 0, %s17
    %s20 = sphi 0, %s18
    %s21 = sphi 0, %s19
    %s33 = sphi 0, %s35
    %s36 = sphi 0, %s33
    %s37 = sphi 0, %s36
    %s53 = sphi 0, %s37
    %s57 = sphi 0, %s57
    %s59 = sphi 0, %s57
    %s60 = sphi 0, %s59
    %s74 = sphi 0, %s60
    %s78 = sphi 0, %s78
    %s80 = sphi 0, %s78
    %s81 = sphi 0, %s80
    %s95 = sphi 0, %s81
  $region4: #{upsampler_forward.2} parent=0 // loop_header_branch
    %12 = sbr.rel (%p10) target = $region8
  $region5: #{upsampler_forward.2} parent=0 // loop_body
    %s14 = ssub.s32 %s9, 1
    %s15 = ssub.s32 %s9, 2
    %s22 = sadd.s32 1, %s17
    %p23 = scmp.ge.s32.totalorder %s22, 1
    %s24 = scalar_select %p23, 0, %s22
    %s25 = sadd.s32 1, %s16
    %s26 = scalar_select %p23, %s25, %s16
    %p27 = scmp.ge.s32.totalorder %s26, 2
    %s28 = scalar_select %p27, 0, %s26
    %s29 = ssub.s32 %s16, %s28
    %s30 = ssub.s32 %s17, %s24
    %s31 = sor.u32 %s29, %s30
    %p32 = scmp.eq.s32.totalorder %s31, 0
    %s34 = sadd.s32 %s33, 1
    %s35 = scalar_select %p32, %s33, %s34
    %p38 = pneg %p32
    %p39 = scmp.eq.s32.totalorder %s9, 1
    %p40 = por %p38, %p39
    %p41 = scmp.ne.s32.totalorder %s33, %s36
    %p42 = scmp.eq.s32.totalorder %s9, 0
    %p43 = por %p41, %p42
    %p44 = scmp.ne.s32.totalorder %s33, %s36
    %p45 = scmp.eq.s32.totalorder %s14, 1
    %p46 = por %p44, %p45
    %p47 = scmp.ne.s32.totalorder %s36, %s37
    %p48 = scmp.eq.s32.totalorder %s14, 0
    %p49 = por %p47, %p48
    %p50 = scmp.ne.s32.totalorder %s36, %s37
    %p51 = scmp.eq.s32.totalorder %s15, 1
    %p52 = por %p50, %p51
    %p54 = scmp.ne.s32.totalorder %s37, %s53
    %p55 = scmp.eq.s32.totalorder %s15, 0
    %p56 = por %p54, %p55
    %s58 = sadd.s32 %s57, 1
    %p61 = scmp.eq.s32.totalorder %s9, 1
    %p62 = scmp.ne.s32.totalorder %s57, %s59
    %p63 = scmp.eq.s32.totalorder %s9, 0
    %p64 = por %p62, %p63
    %p65 = scmp.ne.s32.totalorder %s57, %s59
    %p66 = scmp.eq.s32.totalorder %s14, 1
    %p67 = por %p65, %p66
    %p68 = scmp.ne.s32.totalorder %s59, %s60
    %p69 = scmp.eq.s32.totalorder %s14, 0
    %p70 = por %p68, %p69
    %p71 = scmp.ne.s32.totalorder %s59, %s60
    %p72 = scmp.eq.s32.totalorder %s15, 1
    %p73 = por %p71, %p72
    %p75 = scmp.ne.s32.totalorder %s60, %s74
    %p76 = scmp.eq.s32.totalorder %s15, 0
    %p77 = por %p75, %p76
    %s79 = sadd.s32 %s78, 1
    %p82 = scmp.eq.s32.totalorder %s9, 1
    %p83 = scmp.ne.s32.totalorder %s78, %s80
    %p84 = scmp.eq.s32.totalorder %s9, 0
    %p85 = por %p83, %p84
    %p86 = scmp.ne.s32.totalorder %s78, %s80
    %p87 = scmp.eq.s32.totalorder %s14, 1
    %p88 = por %p86, %p87
    %p89 = scmp.ne.s32.totalorder %s80, %s81
    %p90 = scmp.eq.s32.totalorder %s14, 0
    %p91 = por %p89, %p90
    %p92 = scmp.ne.s32.totalorder %s80, %s81
    %p93 = scmp.eq.s32.totalorder %s15, 1
    %p94 = por %p92, %p93
    %p96 = scmp.ne.s32.totalorder %s81, %s95
    %p97 = scmp.eq.s32.totalorder %s15, 0
    %p98 = por %p96, %p97
    %p99 = scmp.le.s32.totalorder 1, %s9
    %p100 = scmp.lt.s32.totalorder %s9, 3
    %p101 = pnand %p99, %p100
    %p102 = pneg %p101
    // Predicated region
    $region9: #{upsampler_forward.2} parent=5 // pred_check
      _
    $region10: #{upsampler_forward.2} parent=5 // pred_check_branch
      %104 = sbr.rel (%p101) target = $region12
    $region11: #{upsampler_forward.2} parent=5 // pred_region
      %s105 = ssub.s32 %s9, 1
    $region12: #{upsampler_forward.2} parent=5 // pred_fallthru
      _
    %p106 = scmp.lt.s32.totalorder %s9, 2
    // Predicated region
    $region13: #{upsampler_forward.2} parent=5 // pred_check
      %p107 = pneg %p106
    $region14: #{upsampler_forward.2} parent=5 // pred_check_branch
      %109 = sbr.rel (%p107) target = $region16
    $region15: #{upsampler_forward.2} parent=5 // pred_region
      // Predicated region
      $region17: #{upsampler_forward.2} parent=15 // pred_check
        %p110 = pneg %p43
      $region18: #{upsampler_forward.2} parent=15 // pred_check_branch
        %112 = sbr.rel (%p110) target = $region20
      $region19: #{upsampler_forward.2} parent=15 // pred_region
        %s113 = smul.u32 2, %s17
        %p114 = scmp.lt.s32.totalorder %s16, 1
        %s115 = scalar_select %p114, %s16, 1
        %p116 = scmp.lt.s32.totalorder %s113, 1
        %s117 = scalar_select %p116, %s113, 1
        %s118 = smul.addr %s115, 2
        %s119 = sadd.s32 %s117, %s118
        %s120 = smul.addr %s119, 4
        %s121 = scalar_lea.vmem %s0, %s120
        %s122 = smul.u32 2, %s17
      $region20: #{upsampler_forward.2} parent=15 // pred_fallthru
        _
    $region16: #{upsampler_forward.2} parent=5 // pred_fallthru
      _
    %p123 = scmp.le.s32.totalorder 1, %s9
    %p124 = scmp.lt.s32.totalorder %s9, 3
    %p125 = pnand %p123, %p124
    %p126 = pneg %p125
    // Predicated region
    $region21: #{upsampler_forward.2} parent=5 // pred_check
      _
    $region22: #{upsampler_forward.2} parent=5 // pred_check_branch
      %128 = sbr.rel (%p125) target = $region24
    $region23: #{upsampler_forward.2} parent=5 // pred_region
      %s129 = ssub.s32 %s9, 1
      %s130 = smul.u32 2, %s19
      %p131 = scmp.lt.s32.totalorder %s18, 1
      %s132 = scalar_select %p131, %s18, 1
      %p133 = scmp.lt.s32.totalorder %s130, 1
      %s134 = scalar_select %p133, %s130, 1
      %s135 = smul.addr %s132, 2
      %s136 = sadd.s32 %s134, %s135
      %s137 = smul.addr %s136, 4
      %s138 = scalar_lea.vmem %s0, %s137
      %p139 = pneg %p49
      %p140 = pneg %p46
      %p141 = pneg %p70
      %p142 = pneg %p67
      %p143 = pneg %p91
      %p144 = pneg %p88
      %s145 = smul.u32 2, %s19
      %p146 = scmp.lt.s32.totalorder %s18, 1
      %s147 = scalar_select %p146, %s18, 1
      %p148 = scmp.lt.s32.totalorder %s145, 1
      %s149 = scalar_select %p148, %s145, 1
      %s150 = smul.addr %s147, 2
      %s151 = sadd.s32 %s149, %s150
      %s152 = smul.addr %s151, 4
      %s153 = scalar_lea.vmem %s0, %s152
      %s154 = smul.u32 2, %s19
      %p155 = scmp.eq.s32.totalorder %s18, 0
      %p156 = scmp.eq.s32.totalorder %s19, 0
      %p157 = pnand %p155, %p156
      %p158 = pneg %p157
      // Predicated region
      $region25: #{upsampler_forward.2} parent=23 // pred_check
        _
      $region26: #{upsampler_forward.2} parent=23 // pred_check_branch
        %160 = sbr.rel (%p157) target = $region28
      $region27: #{upsampler_forward.2} parent=23 // pred_region
        %vm161 = vcmask 27648
        %162 = vst.msk [vmem:[%s1] sm:$0xf] %vm161, 0.0
        %vm163 = vcmask 3072
        %164 = vst.msk [vmem:[%s2] sm:$0xf] %vm163, 0.0
      $region28: #{upsampler_forward.2} parent=23 // pred_fallthru
        _
      %v165 = vld [vmem:[%s153] sm:$0xff]
      %v166 = vld [vmem:[%s1] sm:$0xf]
      %v168 = vcombine.high %v165, %v165
      %170 = vmatprep.subr.mxu0 %v168
      %171 = vmatpush1.xpose.msra.mxu0 %v165
      %172 = vmatprep.subr.mxu0 0.0
      %173 = vmatpush1.xpose.msra.mxu0 0.0
      %174 = vmatprep.subr.mxu0 0.0
      %175 = vmatpush1.xpose.msra.mxu0 0.0
      %176 = vmatprep.subr.mxu0 0.0
      %177 = vmatpush1.xpose.msra.mxu0 0.0
      %178 = vmatprep.subr.mxu0 0.0
      %179 = vmatpush1.xpose.msra.mxu0 0.0
      %180 = vmatprep.subr.mxu0 0.0
      %181 = vmatpush1.xpose.msra.mxu0 0.0
      %182 = vmatprep.subr.mxu0 0.0
      %183 = vmatpush1.xpose.msra.mxu0 0.0
      %184 = vmatprep.subr.mxu0 0.0
      %185 = vmatpush1.xpose.msra.mxu0 0.0
      %186 = vmatprep.subr.mxu0 0.0
      %187 = vmatpush1.xpose.msra.mxu0 0.0
      %188 = vmatprep.subr.mxu0 0.0
      %189 = vmatpush1.xpose.msra.mxu0 0.0
      %190 = vmatprep.subr.mxu0 0.0
      %191 = vmatpush1.xpose.msra.mxu0 0.0
      %192 = vmatprep.subr.mxu0 0.0
      %193 = vmatpush1.xpose.msra.mxu0 0.0
      %194 = vmatprep.subr.mxu0 0.0
      %195 = vmatpush1.xpose.msra.mxu0 0.0
      %196 = vmatprep.subr.mxu0 0.0
      %197 = vmatpush1.xpose.msra.mxu0 0.0
      %198 = vmatprep.subr.mxu0 0.0
      %199 = vmatpush1.xpose.msra.mxu0 0.0
      %200 = vmatprep.subr.mxu0 0.0
      %201 = vmatpush1.xpose.msra.mxu0 0.0
      %202 = vmatprep.subr.mxu0 0.0
      %203 = vmatpush1.xpose.msra.mxu0 0.0
      %204 = vmatprep.subr.mxu0 0.0
      %205 = vmatpush1.xpose.msra.mxu0 0.0
      %206 = vmatprep.subr.mxu0 0.0
      %207 = vmatpush1.xpose.msra.mxu0 0.0
      %208 = vmatprep.subr.mxu0 0.0
      %209 = vmatpush1.xpose.msra.mxu0 0.0
      %210 = vmatprep.subr.mxu0 0.0
      %211 = vmatpush1.xpose.msra.mxu0 0.0
      %212 = vmatprep.subr.mxu0 0.0
      %213 = vmatpush1.xpose.msra.mxu0 0.0
      %214 = vmatprep.subr.mxu0 0.0
      %215 = vmatpush1.xpose.msra.mxu0 0.0
      %216 = vmatprep.subr.mxu0 0.0
      %217 = vmatpush1.xpose.msra.mxu0 0.0
      %218 = vmatprep.subr.mxu0 0.0
      %219 = vmatpush1.xpose.msra.mxu0 0.0
      %220 = vmatprep.subr.mxu0 0.0
      %221 = vmatpush1.xpose.msra.mxu0 0.0
      %222 = vmatprep.subr.mxu0 0.0
      %223 = vmatpush1.xpose.msra.mxu0 0.0
      %224 = vmatprep.subr.mxu0 0.0
      %225 = vmatpush1.xpose.msra.mxu0 0.0
      %226 = vmatprep.subr.mxu0 0.0
      %227 = vmatpush1.xpose.msra.mxu0 0.0
      %228 = vmatprep.subr.mxu0 0.0
      %229 = vmatpush1.xpose.msra.mxu0 0.0
      %230 = vmatprep.subr.mxu0 0.0
      %231 = vmatpush1.xpose.msra.mxu0 0.0
      %232 = vmatprep.subr.mxu0 0.0
      %233 = vmatpush1.xpose.msra.mxu0 0.0
      %234 = vmatprep.mubr.f32.mxu0 %v168
      %235 = vmatmul.mubr.f32.gmra.mrb[0].mxu0 %v165
      %v236 = vpop.f32.mrb[0].mxu0
      %v237 = vadd.f32 0.0, %v236
      %v238 = vpop.f32.mrb[0].mxu0
      %239 = vdwg.mxu0
      %v240 = vadd.f32 %v166, %v237
      %vm241 = vcmask 27648
      %242 = vst.msk [vmem:[%s1] sm:$0xf] %vm241, %v240
      %v243 = vld [vmem:[%s2] sm:$0xf]
      %vm244 = vcmask 1043456
      %v245 = vsel %vm244, %v165, 0.0
      %v246 = vsel %vm244, %v168, 0.0
      %v247 = vadd.f32 %v245, %v246
      %248 = vadd.xlane.f32.xlu0 %v247
      %v249 = vpop.xlane.xlu0 %248
      %v250 = vadd.f32 %v243, %v249
      %vm251 = vcmask 3072
      %252 = vst.msk [vmem:[%s2] sm:$0xf] %vm251, %v250
      // Predicated region
      $region29: #{upsampler_forward.2} parent=23 // pred_check
        %p253 = pneg %p67
      $region30: #{upsampler_forward.2} parent=23 // pred_check_branch
        %255 = sbr.rel (%p253) target = $region32
      $region31: #{upsampler_forward.2} parent=23 // pred_region
        _
      $region32: #{upsampler_forward.2} parent=23 // pred_fallthru
        _
      // Predicated region
      $region33: #{upsampler_forward.2} parent=23 // pred_check
        %p256 = pneg %p88
      $region34: #{upsampler_forward.2} parent=23 // pred_check_branch
        %258 = sbr.rel (%p256) target = $region36
      $region35: #{upsampler_forward.2} parent=23 // pred_region
        _
      $region36: #{upsampler_forward.2} parent=23 // pred_fallthru
        _
      // Predicated region
      $region37: #{upsampler_forward.2} parent=23 // pred_check
        %p259 = pneg %p67
      $region38: #{upsampler_forward.2} parent=23 // pred_check_branch
        %261 = sbr.rel (%p259) target = $region40
      $region39: #{upsampler_forward.2} parent=23 // pred_region
        _
      $region40: #{upsampler_forward.2} parent=23 // pred_fallthru
        _
      // Predicated region
      $region41: #{upsampler_forward.2} parent=23 // pred_check
        %p262 = pneg %p88
      $region42: #{upsampler_forward.2} parent=23 // pred_check_branch
        %264 = sbr.rel (%p262) target = $region44
      $region43: #{upsampler_forward.2} parent=23 // pred_region
        _
      $region44: #{upsampler_forward.2} parent=23 // pred_fallthru
        _
    $region24: #{upsampler_forward.2} parent=5 // pred_fallthru
      _
    %p265 = scmp.le.s32.totalorder 2, %s9
    // Predicated region
    $region45: #{upsampler_forward.2} parent=5 // pred_check
      %p266 = pneg %p265
    $region46: #{upsampler_forward.2} parent=5 // pred_check_branch
      %268 = sbr.rel (%p266) target = $region48
    $region47: #{upsampler_forward.2} parent=5 // pred_region
      %s269 = ssub.s32 %s9, 2
    $region48: #{upsampler_forward.2} parent=5 // pred_fallthru
      _
  $region6: #{upsampler_forward.2} parent=0 // loop_footer
    %s13 = sadd.s32 1, %s9
  $region7: #{upsampler_forward.2} parent=0 // loop_footer_branch
    %8 = sbr.rel target = $region3
  $region8: #{upsampler_forward.2} parent=0 // loop_exit
    _

// kernel: upsampler_forward.3
$region0: #{upsampler_forward.3}
  #allocation0 [shape = 'u32[]', space=smem, size = 0x4, offset = 0x4, fixed_abs, tag = 'smem constant byte address 0x4 - core index']
  #allocation1 [shape = 'u32[144,128]{1,0:T(1,128)}', space=vmem, size = 0x12000, scoped, tag = 'internal scratch']
  %s0 = inlined_call_operand.vmem [shape: f32[2,4,256], index: 0, kind: input, shape index: {}]
  %s1 = inlined_call_operand.vmem [shape: f32[32,4], index: 1, kind: input, shape index: {}]
  %s2 = inlined_call_operand.vmem [shape: f32[32,1], index: 2, kind: input, shape index: {}]
  %s3 = inlined_call_operand.vmem [shape: f32[32,1], index: 3, kind: input, shape index: {}]
  %s4 = inlined_call_operand.vmem [shape: f32[2,32,256], index: 4, kind: output, shape index: {}]
  %s5 = sld [smem:[#allocation0]]
  $region49: #{upsampler_forward.3} parent=0
    _
  %s7 = ssub.s32 1, %s5
  %s8 = scalar_select 0, %s7, %s5
  loop: start=0, step=1, limit=4
  $region2: #{upsampler_forward.3} parent=0 // loop_pre_header
    _
  $region3: #{upsampler_forward.3} parent=0 // loop_header
    %s10 = sphi 0, %s14
    %p11 = scmp.ge.s32.totalorder %s10, 4
    %s17 = sphi 0, %s29
    %s18 = sphi 0, %s25
    %s19 = sphi 0, %s17
    %s20 = sphi 0, %s18
    %s21 = sphi 0, %s19
    %s22 = sphi 0, %s20
    %s34 = sphi 0, %s36
    %s37 = sphi 0, %s34
    %s38 = sphi 0, %s37
    %s54 = sphi 0, %s38
    %s58 = sphi 0, %s58
    %s60 = sphi 0, %s58
    %s61 = sphi 0, %s60
    %s75 = sphi 0, %s61
    %s79 = sphi 0, %s79
    %s81 = sphi 0, %s79
    %s82 = sphi 0, %s81
    %s96 = sphi 0, %s82
    %s100 = sphi 0, %s100
    %s102 = sphi 0, %s100
    %s103 = sphi 0, %s102
    %s117 = sphi 0, %s103
    %s125 = sphi 0, %s127
    %s128 = sphi 0, %s125
    %s129 = sphi 0, %s128
    %s145 = sphi 0, %s129
  $region4: #{upsampler_forward.3} parent=0 // loop_header_branch
    %13 = sbr.rel (%p11) target = $region8
  $region5: #{upsampler_forward.3} parent=0 // loop_body
    %s15 = ssub.s32 %s10, 1
    %s16 = ssub.s32 %s10, 2
    %s23 = sadd.s32 1, %s18
    %p24 = scmp.ge.s32.totalorder %s23, 1
    %s25 = scalar_select %p24, 0, %s23
    %s26 = sadd.s32 1, %s17
    %s27 = scalar_select %p24, %s26, %s17
    %p28 = scmp.ge.s32.totalorder %s27, 2
    %s29 = scalar_select %p28, 0, %s27
    %s30 = ssub.s32 %s17, %s29
    %s31 = ssub.s32 %s18, %s25
    %s32 = sor.u32 %s30, %s31
    %p33 = scmp.eq.s32.totalorder %s32, 0
    %s35 = sadd.s32 %s34, 1
    %s36 = scalar_select %p33, %s34, %s35
    %p39 = pneg %p33
    %p40 = scmp.eq.s32.totalorder %s10, 1
    %p41 = por %p39, %p40
    %p42 = scmp.ne.s32.totalorder %s34, %s37
    %p43 = scmp.eq.s32.totalorder %s10, 0
    %p44 = por %p42, %p43
    %p45 = scmp.ne.s32.totalorder %s34, %s37
    %p46 = scmp.eq.s32.totalorder %s15, 1
    %p47 = por %p45, %p46
    %p48 = scmp.ne.s32.totalorder %s37, %s38
    %p49 = scmp.eq.s32.totalorder %s15, 0
    %p50 = por %p48, %p49
    %p51 = scmp.ne.s32.totalorder %s37, %s38
    %p52 = scmp.eq.s32.totalorder %s16, 1
    %p53 = por %p51, %p52
    %p55 = scmp.ne.s32.totalorder %s38, %s54
    %p56 = scmp.eq.s32.totalorder %s16, 0
    %p57 = por %p55, %p56
    %s59 = sadd.s32 %s58, 1
    %p62 = scmp.eq.s32.totalorder %s10, 1
    %p63 = scmp.ne.s32.totalorder %s58, %s60
    %p64 = scmp.eq.s32.totalorder %s10, 0
    %p65 = por %p63, %p64
    %p66 = scmp.ne.s32.totalorder %s58, %s60
    %p67 = scmp.eq.s32.totalorder %s15, 1
    %p68 = por %p66, %p67
    %p69 = scmp.ne.s32.totalorder %s60, %s61
    %p70 = scmp.eq.s32.totalorder %s15, 0
    %p71 = por %p69, %p70
    %p72 = scmp.ne.s32.totalorder %s60, %s61
    %p73 = scmp.eq.s32.totalorder %s16, 1
    %p74 = por %p72, %p73
    %p76 = scmp.ne.s32.totalorder %s61, %s75
    %p77 = scmp.eq.s32.totalorder %s16, 0
    %p78 = por %p76, %p77
    %s80 = sadd.s32 %s79, 1
    %p83 = scmp.eq.s32.totalorder %s10, 1
    %p84 = scmp.ne.s32.totalorder %s79, %s81
    %p85 = scmp.eq.s32.totalorder %s10, 0
    %p86 = por %p84, %p85
    %p87 = scmp.ne.s32.totalorder %s79, %s81
    %p88 = scmp.eq.s32.totalorder %s15, 1
    %p89 = por %p87, %p88
    %p90 = scmp.ne.s32.totalorder %s81, %s82
    %p91 = scmp.eq.s32.totalorder %s15, 0
    %p92 = por %p90, %p91
    %p93 = scmp.ne.s32.totalorder %s81, %s82
    %p94 = scmp.eq.s32.totalorder %s16, 1
    %p95 = por %p93, %p94
    %p97 = scmp.ne.s32.totalorder %s82, %s96
    %p98 = scmp.eq.s32.totalorder %s16, 0
    %p99 = por %p97, %p98
    %s101 = sadd.s32 %s100, 1
    %p104 = scmp.eq.s32.totalorder %s10, 1
    %p105 = scmp.ne.s32.totalorder %s100, %s102
    %p106 = scmp.eq.s32.totalorder %s10, 0
    %p107 = por %p105, %p106
    %p108 = scmp.ne.s32.totalorder %s100, %s102
    %p109 = scmp.eq.s32.totalorder %s15, 1
    %p110 = por %p108, %p109
    %p111 = scmp.ne.s32.totalorder %s102, %s103
    %p112 = scmp.eq.s32.totalorder %s15, 0
    %p113 = por %p111, %p112
    %p114 = scmp.ne.s32.totalorder %s102, %s103
    %p115 = scmp.eq.s32.totalorder %s16, 1
    %p116 = por %p114, %p115
    %p118 = scmp.ne.s32.totalorder %s103, %s117
    %p119 = scmp.eq.s32.totalorder %s16, 0
    %p120 = por %p118, %p119
    %s121 = ssub.s32 %s17, %s29
    %s122 = ssub.s32 %s18, %s25
    %s123 = sor.u32 %s121, %s122
    %p124 = scmp.eq.s32.totalorder %s123, 0
    %s126 = sadd.s32 %s125, 1
    %s127 = scalar_select %p124, %s125, %s126
    %p130 = pneg %p124
    %p131 = scmp.eq.s32.totalorder %s10, 1
    %p132 = por %p130, %p131
    %p133 = scmp.ne.s32.totalorder %s125, %s128
    %p134 = scmp.eq.s32.totalorder %s10, 0
    %p135 = por %p133, %p134
    %p136 = scmp.ne.s32.totalorder %s125, %s128
    %p137 = scmp.eq.s32.totalorder %s15, 1
    %p138 = por %p136, %p137
    %p139 = scmp.ne.s32.totalorder %s128, %s129
    %p140 = scmp.eq.s32.totalorder %s15, 0
    %p141 = por %p139, %p140
    %p142 = scmp.ne.s32.totalorder %s128, %s129
    %p143 = scmp.eq.s32.totalorder %s16, 1
    %p144 = por %p142, %p143
    %p146 = scmp.ne.s32.totalorder %s129, %s145
    %p147 = scmp.eq.s32.totalorder %s16, 0
    %p148 = por %p146, %p147
    %p149 = scmp.le.s32.totalorder 1, %s10
    %p150 = scmp.lt.s32.totalorder %s10, 3
    %p151 = pnand %p149, %p150
    %p152 = pneg %p151
    // Predicated region
    $region9: #{upsampler_forward.3} parent=5 // pred_check
      _
    $region10: #{upsampler_forward.3} parent=5 // pred_check_branch
      %154 = sbr.rel (%p151) target = $region12
    $region11: #{upsampler_forward.3} parent=5 // pred_region
      %s155 = ssub.s32 %s10, 1
      // Predicated region
      $region13: #{upsampler_forward.3} parent=11 // pred_check
        %p156 = pneg %p71
      $region14: #{upsampler_forward.3} parent=11 // pred_check_branch
        %158 = sbr.rel (%p156) target = $region16
      $region15: #{upsampler_forward.3} parent=11 // pred_region
        _
      $region16: #{upsampler_forward.3} parent=11 // pred_fallthru
        _
      // Predicated region
      $region17: #{upsampler_forward.3} parent=11 // pred_check
        %p159 = pneg %p92
      $region18: #{upsampler_forward.3} parent=11 // pred_check_branch
        %161 = sbr.rel (%p159) target = $region20
      $region19: #{upsampler_forward.3} parent=11 // pred_region
        _
      $region20: #{upsampler_forward.3} parent=11 // pred_fallthru
        _
      // Predicated region
      $region21: #{upsampler_forward.3} parent=11 // pred_check
        %p162 = pneg %p113
      $region22: #{upsampler_forward.3} parent=11 // pred_check_branch
        %164 = sbr.rel (%p162) target = $region24
      $region23: #{upsampler_forward.3} parent=11 // pred_region
        _
      $region24: #{upsampler_forward.3} parent=11 // pred_fallthru
        _
    $region12: #{upsampler_forward.3} parent=5 // pred_fallthru
      _
    %p165 = scmp.lt.s32.totalorder %s10, 2
    // Predicated region
    $region25: #{upsampler_forward.3} parent=5 // pred_check
      %p166 = pneg %p165
    $region26: #{upsampler_forward.3} parent=5 // pred_check_branch
      %168 = sbr.rel (%p166) target = $region28
    $region27: #{upsampler_forward.3} parent=5 // pred_region
      // Predicated region
      $region29: #{upsampler_forward.3} parent=27 // pred_check
        %p169 = pneg %p44
      $region30: #{upsampler_forward.3} parent=27 // pred_check_branch
        %171 = sbr.rel (%p169) target = $region32
      $region31: #{upsampler_forward.3} parent=27 // pred_region
        %s172 = smul.u32 2, %s18
        %p173 = scmp.lt.s32.totalorder %s17, 1
        %s174 = scalar_select %p173, %s17, 1
        %p175 = scmp.lt.s32.totalorder %s172, 1
        %s176 = scalar_select %p175, %s172, 1
        %s177 = smul.addr %s174, 2
        %s178 = sadd.s32 %s176, %s177
        %s179 = smul.addr %s178, 4
        %s180 = scalar_lea.vmem %s0, %s179
        %s181 = smul.u32 2, %s18
      $region32: #{upsampler_forward.3} parent=27 // pred_fallthru
        _
    $region28: #{upsampler_forward.3} parent=5 // pred_fallthru
      _
    %p182 = scmp.le.s32.totalorder 1, %s10
    %p183 = scmp.lt.s32.totalorder %s10, 3
    %p184 = pnand %p182, %p183
    %p185 = pneg %p184
    // Predicated region
    $region33: #{upsampler_forward.3} parent=5 // pred_check
      _
    $region34: #{upsampler_forward.3} parent=5 // pred_check_branch
      %187 = sbr.rel (%p184) target = $region36
    $region35: #{upsampler_forward.3} parent=5 // pred_region
      %s188 = ssub.s32 %s10, 1
      %s189 = smul.u32 2, %s20
      %p190 = scmp.lt.s32.totalorder %s19, 1
      %s191 = scalar_select %p190, %s19, 1
      %p192 = scmp.lt.s32.totalorder %s189, 1
      %s193 = scalar_select %p192, %s189, 1
      %s194 = smul.addr %s191, 2
      %s195 = sadd.s32 %s193, %s194
      %s196 = smul.addr %s195, 4
      %s197 = scalar_lea.vmem %s0, %s196
      %p198 = pneg %p50
      %p199 = pneg %p47
      %p200 = pneg %p71
      %p201 = pneg %p68
      %p202 = pneg %p92
      %p203 = pneg %p89
      %p204 = pneg %p113
      %p205 = pneg %p110
      %p206 = pneg %p141
      %p207 = pneg %p138
      %s208 = smul.u32 2, %s20
      %p209 = scmp.lt.s32.totalorder %s19, 1
      %s210 = scalar_select %p209, %s19, 1
      %p211 = scmp.lt.s32.totalorder %s208, 1
      %s212 = scalar_select %p211, %s208, 1
      %s213 = smul.addr %s210, 8
      %s214 = sadd.s32 %s212, %s213
      %s215 = smul.addr %s214, 8
      %s216 = scalar_lea.vmem %s4, %s215
      %s217 = smul.u32 2, %s20
      %p218 = scmp.lt.s32.totalorder %s19, 1
      %s219 = scalar_select %p218, %s19, 1
      %p220 = scmp.lt.s32.totalorder %s217, 1
      %s221 = scalar_select %p220, %s217, 1
      %s222 = smul.addr %s219, 2
      %s223 = sadd.s32 %s221, %s222
      %s224 = smul.addr %s223, 4
      %s225 = scalar_lea.vmem %s0, %s224
      %s226 = smul.u32 2, %s20
      %s227 = smul.u32 2, %s20
      %p228 = scmp.lt.s32.totalorder %s19, 1
      %s229 = scalar_select %p228, %s19, 1
      %p230 = scmp.lt.s32.totalorder %s227, 1
      %s231 = scalar_select %p230, %s227, 1
      %s232 = smul.addr %s229, 8
      %s233 = sadd.s32 %s231, %s232
      %s234 = smul.addr %s233, 8
      %s235 = scalar_lea.vmem %s4, %s234
      %s236 = smul.u32 2, %s20
      %v237 = vld [vmem:[%s225] sm:$0xff]
      %v238 = vld [vmem:[%s1] sm:$0xff]
      %v239 = vld [vmem:[%s1 + $0x8] sm:$0xff]
      %v240 = vld [vmem:[%s1 + $0x10] sm:$0xff]
      %v241 = vld [vmem:[%s1 + $0x18] sm:$0xff]
      %v243 = vcombine.high %v237, %v237
      %vm244 = vcmask 31744
      %v246 = vsel %vm244, %v238, 0
      %v249 = vsel %vm244, %v239, 0
      %v252 = vsel %vm244, %v240, 0
      %v255 = vsel %vm244, %v241, 0
      %vm257 = vcmask 1043456
      %v258 = vsel %vm257, %v237, 0
      %v260 = vsel %vm257, %v243, 0
      %262 = vmatprep.subr.mxu0 %v260
      %263 = vmatpush1.msra.mxu0 %v258
      %264 = vmatprep.subr.mxu0 0.0
      %265 = vmatpush1.msra.mxu0 0.0
      %266 = vmatprep.subr.mxu0 0.0
      %267 = vmatpush1.msra.mxu0 0.0
      %268 = vmatprep.subr.mxu0 0.0
      %269 = vmatpush1.msra.mxu0 0.0
      %270 = vmatprep.subr.mxu0 0.0
      %271 = vmatpush1.msra.mxu0 0.0
      %272 = vmatprep.subr.mxu0 0.0
      %273 = vmatpush1.msra.mxu0 0.0
      %274 = vmatprep.subr.mxu0 0.0
      %275 = vmatpush1.msra.mxu0 0.0
      %276 = vmatprep.subr.mxu0 0.0
      %277 = vmatpush1.msra.mxu0 0.0
      %278 = vmatprep.subr.mxu0 0.0
      %279 = vmatpush1.msra.mxu0 0.0
      %280 = vmatprep.subr.mxu0 0.0
      %281 = vmatpush1.msra.mxu0 0.0
      %282 = vmatprep.subr.mxu0 0.0
      %283 = vmatpush1.msra.mxu0 0.0
      %284 = vmatprep.subr.mxu0 0.0
      %285 = vmatpush1.msra.mxu0 0.0
      %286 = vmatprep.subr.mxu0 0.0
      %287 = vmatpush1.msra.mxu0 0.0
      %288 = vmatprep.subr.mxu0 0.0
      %289 = vmatpush1.msra.mxu0 0.0
      %290 = vmatprep.subr.mxu0 0.0
      %291 = vmatpush1.msra.mxu0 0.0
      %292 = vmatprep.subr.mxu0 0.0
      %293 = vmatpush1.msra.mxu0 0.0
      %294 = vmatprep.subr.mxu0 0.0
      %295 = vmatpush1.msra.mxu0 0.0
      %296 = vmatprep.subr.mxu0 0.0
      %297 = vmatpush1.msra.mxu0 0.0
      %298 = vmatprep.subr.mxu0 0.0
      %299 = vmatpush1.msra.mxu0 0.0
      %300 = vmatprep.subr.mxu0 0.0
      %301 = vmatpush1.msra.mxu0 0.0
      %302 = vmatprep.subr.mxu0 0.0
      %303 = vmatpush1.msra.mxu0 0.0
      %304 = vmatprep.subr.mxu0 0.0
      %305 = vmatpush1.msra.mxu0 0.0
      %306 = vmatprep.subr.mxu0 0.0
      %307 = vmatpush1.msra.mxu0 0.0
      %308 = vmatprep.subr.mxu0 0.0
      %309 = vmatpush1.msra.mxu0 0.0
      %310 = vmatprep.subr.mxu0 0.0
      %311 = vmatpush1.msra.mxu0 0.0
      %312 = vmatprep.subr.mxu0 0.0
      %313 = vmatpush1.msra.mxu0 0.0
      %314 = vmatprep.subr.mxu0 0.0
      %315 = vmatpush1.msra.mxu0 0.0
      %316 = vmatprep.subr.mxu0 0.0
      %317 = vmatpush1.msra.mxu0 0.0
      %318 = vmatprep.subr.mxu0 0.0
      %319 = vmatpush1.msra.mxu0 0.0
      %320 = vmatprep.subr.mxu0 0.0
      %321 = vmatpush1.msra.mxu0 0.0
      %322 = vmatprep.subr.mxu0 0.0
      %323 = vmatpush1.msra.mxu0 0.0
      %324 = vmatprep.subr.mxu0 0.0
      %325 = vmatpush1.msra.mxu0 0.0
      %326 = vmatprep.mubr.f32.mxu0 0.0
      %327 = vmatmul.mubr.f32.gmra.mrb[0].mxu0 %v246
      %v328 = vpop.f32.mrb[0].mxu0
      %v329 = vadd.f32 0.0, %v328
      %v330 = vpop.f32.mrb[0].mxu0
      %v331 = vadd.f32 0.0, %v330
      %332 = vmatprep.mubr.f32.mxu0 0.0
      %333 = vmatmul.mubr.f32.gmra.mrb[0].mxu0 %v249
      %v334 = vpop.f32.mrb[0].mxu0
      %v335 = vadd.f32 0.0, %v334
      %v336 = vpop.f32.mrb[0].mxu0
      %v337 = vadd.f32 0.0, %v336
      %338 = vmatprep.mubr.f32.mxu0 0.0
      %339 = vmatmul.mubr.f32.gmra.mrb[0].mxu0 %v252
      %v340 = vpop.f32.mrb[0].mxu0
      %v341 = vadd.f32 0.0, %v340
      %v342 = vpop.f32.mrb[0].mxu0
      %v343 = vadd.f32 0.0, %v342
      %344 = vmatprep.mubr.f32.mxu0 0.0
      %345 = vmatmul.mubr.f32.gmra.mrb[0].mxu0 %v255
      %v346 = vpop.f32.mrb[0].mxu0
      %v347 = vadd.f32 0.0, %v346
      %v348 = vpop.f32.mrb[0].mxu0
      %v349 = vadd.f32 0.0, %v348
      %350 = vdwg.mxu0
      %v351 = vld [vmem:[%s2] sm:$0xff]
      %v352 = vld [vmem:[%s2 + $0x8] sm:$0xff]
      %v353 = vld [vmem:[%s2 + $0x10] sm:$0xff]
      %v354 = vld [vmem:[%s2 + $0x18] sm:$0xff]
      %356 = vset.pattern.permute.xlu0 0
      %357 = vperm.xlu0 %356, %v351
      %v358 = vpop.permute.xlu0 %357
      %361 = vset.pattern.permute.xlu0 0
      %362 = vperm.xlu0 %361, %v352
      %v363 = vpop.permute.xlu0 %362
      %366 = vset.pattern.permute.xlu0 0
      %367 = vperm.xlu0 %366, %v353
      %v368 = vpop.permute.xlu0 %367
      %371 = vset.pattern.permute.xlu0 0
      %372 = vperm.xlu0 %371, %v354
      %v373 = vpop.permute.xlu0 %372
      %v375 = vmul.f32 %v329, %v358
      %v376 = vmul.f32 %v331, %v358
      %v377 = vmul.f32 %v335, %v363
      %v378 = vmul.f32 %v337, %v363
      %v379 = vmul.f32 %v341, %v368
      %v380 = vmul.f32 %v343, %v368
      %v381 = vmul.f32 %v347, %v373
      %v382 = vmul.f32 %v349, %v373
      %v383 = vld [vmem:[%s3] sm:$0xff]
      %v384 = vld [vmem:[%s3 + $0x8] sm:$0xff]
      %v385 = vld [vmem:[%s3 + $0x10] sm:$0xff]
      %v386 = vld [vmem:[%s3 + $0x18] sm:$0xff]
      %388 = vset.pattern.permute.xlu0 0
      %389 = vperm.xlu0 %388, %v383
      %v390 = vpop.permute.xlu0 %389
      %393 = vset.pattern.permute.xlu0 0
      %394 = vperm.xlu0 %393, %v384
      %v395 = vpop.permute.xlu0 %394
      %398 = vset.pattern.permute.xlu0 0
      %399 = vperm.xlu0 %398, %v385
      %v400 = vpop.permute.xlu0 %399
      %403 = vset.pattern.permute.xlu0 0
      %404 = vperm.xlu0 %403, %v386
      %v405 = vpop.permute.xlu0 %404
      %v407 = vadd.f32 %v375, %v390
      %v408 = vadd.f32 %v376, %v390
      %v409 = vadd.f32 %v377, %v395
      %v410 = vadd.f32 %v378, %v395
      %v411 = vadd.f32 %v379, %v400
      %v412 = vadd.f32 %v380, %v400
      %v413 = vadd.f32 %v381, %v405
      %v414 = vadd.f32 %v382, %v405
      %v415 = vmax.f32 %v407, 0.0
      %v416 = vmax.f32 %v408, 0.0
      %v417 = vmax.f32 %v409, 0.0
      %v418 = vmax.f32 %v410, 0.0
      %v419 = vmax.f32 %v411, 0.0
      %v420 = vmax.f32 %v412, 0.0
      %v421 = vmax.f32 %v413, 0.0
      %v422 = vmax.f32 %v414, 0.0
      %423 = vst [vmem:[%s235] sm:$0xff] %v415
      %424 = vst [vmem:[%s235 + $0x8] sm:$0xff] %v416
      %425 = vst [vmem:[%s235 + $0x10] sm:$0xff] %v417
      %426 = vst [vmem:[%s235 + $0x18] sm:$0xff] %v418
      %427 = vst [vmem:[%s235 + $0x20] sm:$0xff] %v419
      %428 = vst [vmem:[%s235 + $0x28] sm:$0xff] %v420
      %429 = vst [vmem:[%s235 + $0x30] sm:$0xff] %v421
      %430 = vst [vmem:[%s235 + $0x38] sm:$0xff] %v422
      %s431 = smul.u32 2, %s20
      %p432 = scmp.lt.s32.totalorder %s19, 1
      %s433 = scalar_select %p432, %s19, 1
      %p434 = scmp.lt.s32.totalorder %s431, 1
      %s435 = scalar_select %p434, %s431, 1
      %s436 = smul.addr %s433, 8
      %s437 = sadd.s32 %s435, %s436
      %s438 = smul.addr %s437, 8
      %s439 = scalar_lea.vmem %s4, %s438
      // Predicated region
      $region37: #{upsampler_forward.3} parent=35 // pred_check
        %p440 = pneg %p138
      $region38: #{upsampler_forward.3} parent=35 // pred_check_branch
        %442 = sbr.rel (%p440) target = $region40
      $region39: #{upsampler_forward.3} parent=35 // pred_region
        %s443 = smul.u32 2, %s20
      $region40: #{upsampler_forward.3} parent=35 // pred_fallthru
        _
    $region36: #{upsampler_forward.3} parent=5 // pred_fallthru
      _
    %p444 = scmp.le.s32.totalorder 2, %s10
    // Predicated region
    $region41: #{upsampler_forward.3} parent=5 // pred_check
      %p445 = pneg %p444
    $region42: #{upsampler_forward.3} parent=5 // pred_check_branch
      %447 = sbr.rel (%p445) target = $region44
    $region43: #{upsampler_forward.3} parent=5 // pred_region
      %s448 = ssub.s32 %s10, 2
      // Predicated region
      $region45: #{upsampler_forward.3} parent=43 // pred_check
        %p449 = pneg %p144
      $region46: #{upsampler_forward.3} parent=43 // pred_check_branch
        %451 = sbr.rel (%p449) target = $region48
      $region47: #{upsampler_forward.3} parent=43 // pred_region
        %s452 = smul.u32 2, %s22
        %p453 = scmp.lt.s32.totalorder %s21, 1
        %s454 = scalar_select %p453, %s21, 1
        %p455 = scmp.lt.s32.totalorder %s452, 1
        %s456 = scalar_select %p455, %s452, 1
        %s457 = smul.addr %s454, 8
        %s458 = sadd.s32 %s456, %s457
        %s459 = smul.addr %s458, 8
        %s460 = scalar_lea.vmem %s4, %s459
      $region48: #{upsampler_forward.3} parent=43 // pred_fallthru
        _
    $region44: #{upsampler_forward.3} parent=5 // pred_fallthru
      _
  $region6: #{upsampler_forward.3} parent=0 // loop_footer
    %s14 = sadd.s32 1, %s10
  $region7: #{upsampler_forward.3} parent=0 // loop_footer_branch
    %9 = sbr.rel target = $region3
  $region8: #{upsampler_forward.3} parent=0 // loop_exit
    _

</llo_original>
